<compile_context>
chip_gen: v7x
topology: tpu7x:2x2x1
jax: 0.10.0
libtpu: 0.0.40
codegen_flags: <defaults>
</compile_context>

<pallas_src>
import numpy as np
import jax
import jax.numpy as jnp
from jax import lax
from jax.experimental import pallas as pl
from jax.experimental.pallas import tpu as pltpu


def _round_up(x, m):
    return (x + m - 1) // m * m


def build_block_sparse_meta(weight, to, tk):
    """Init-time (host-side) analysis of the weight's block sparsity.

    Returns
      blk_idx : int32[n_j, max_cnt]  for each output tile-row j, the k-block
                indices containing any nonzero; padded entries repeat the last
                valid index (same block index => no new DMA, compute skipped).
      blk_cnt : int32[n_j]           number of valid entries per row.
    """
    w = np.asarray(jax.device_get(weight))
    O, I = w.shape
    n_j = _round_up(O, to) // to
    n_k = _round_up(I, tk) // tk
    wp = np.zeros((n_j * to, n_k * tk), dtype=np.float32)
    wp[:O, :I] = w
    blocks = wp.reshape(n_j, to, n_k, tk)
    nz = np.abs(blocks).sum(axis=(1, 3)) != 0          # [n_j, n_k]
    cnts = nz.sum(axis=1).astype(np.int32)
    max_cnt = max(int(cnts.max()), 1)
    idx = np.zeros((n_j, max_cnt), dtype=np.int32)
    for j in range(n_j):
        ks = np.nonzero(nz[j])[0].astype(np.int32)
        if ks.size:
            idx[j, :ks.size] = ks
            idx[j, ks.size:] = ks[-1]                  # repeat -> no extra DMA
        # all-zero row: idx stays 0, cnt 0 (compute fully skipped)
    return jnp.asarray(idx, dtype=jnp.int32), jnp.asarray(cnts, dtype=jnp.int32)


def _sparse_linear_kernel(blk_idx_ref, blk_cnt_ref, x_ref, w_ref, b_ref, o_ref):
    """One (tb, to) output tile; the k axis walks only nonzero weight blocks.

    x_ref : (tb, tk)  input tile at k-block blk_idx[j, k]
    w_ref : (to, tk)  weight tile in native (O, I) layout (no transpose pass)
    b_ref : (1,  to)  bias tile
    o_ref : (tb, to)  f32 output tile, resident across the k axis
    """
    del blk_idx_ref  # only consumed by the index_maps
    j = pl.program_id(1)
    k = pl.program_id(2)

    @pl.when(k == 0)
    def _():
        # Fold the bias into the accumulator init.
        o_ref[...] = jnp.broadcast_to(b_ref[...], o_ref.shape).astype(o_ref.dtype)

    @pl.when(k < blk_cnt_ref[j])
    def _():
        # x:(tb,tk) . W:(to,tk) contracted on tk -> (tb,to); accumulate in f32
        # directly into the resident output block (no scratch, no extra copy).
        o_ref[...] += lax.dot_general(
            x_ref[...], w_ref[...],
            dimension_numbers=(((1,), (1,)), ((), ())),
            preferred_element_type=jnp.float32,
        )


def sparse_linear(x, weight, bias=None, blk_idx=None, blk_cnt=None, *,
                  tb=128, to=256, tk=512):
    """y = x @ weight.T + bias  with x:(B,I), weight:(O,I), bias:(O,) or None."""
    B, I = x.shape
    O, I2 = weight.shape
    assert I == I2

    # Clamp tiles to the (padded) problem; keep (8,128) alignment.
    tb = min(tb, _round_up(B, 8))
    to = min(to, _round_up(O, 128))
    tk = min(tk, _round_up(I, 128))
    Bp, Op, Ip = _round_up(B, tb), _round_up(O, to), _round_up(I, tk)

    if (blk_idx is None or blk_cnt is None
            or blk_idx.shape[0] != Op // to or blk_cnt.shape[0] != Op // to):
        # Fallback: analyze per call. Prefer precomputing at load_weight time.
        blk_idx, blk_cnt = build_block_sparse_meta(weight, to, tk)
    max_cnt = int(blk_idx.shape[1])
    blk_idx_flat = blk_idx.reshape(-1).astype(jnp.int32)   # 1-D SMEM (no 2-D pad)
    blk_cnt = blk_cnt.astype(jnp.int32)

    if bias is None:
        bias = jnp.zeros((O,), dtype=jnp.float32)

    # Zero-pad operands to tile multiples only when needed (zeros don't alter y).
    xp = x if (Bp, Ip) == (B, I) else jnp.zeros((Bp, Ip), x.dtype).at[:B, :I].set(x)
    wp = weight if (Op, Ip) == (O, I) else (
        jnp.zeros((Op, Ip), weight.dtype).at[:O, :I].set(weight))
    bp = bias.reshape(1, O) if Op == O else (
        jnp.zeros((1, Op), bias.dtype).at[0, :O].set(bias))

    grid = (Bp // tb, Op // to, max_cnt)

    # Explicit VMEM budget: double-buffered x & W tiles + resident out + bias.
    x_isz = jnp.dtype(x.dtype).itemsize
    w_isz = jnp.dtype(weight.dtype).itemsize
    tile_bytes = 2 * (tb * tk * x_isz + to * tk * w_isz) + tb * to * 4 + to * 4
    vmem_limit = int(min(max(4 * tile_bytes, 16 << 20), 64 << 20))

    out = pl.pallas_call(
        _sparse_linear_kernel,
        out_shape=jax.ShapeDtypeStruct((Bp, Op), jnp.float32),
        grid_spec=pltpu.PrefetchScalarGridSpec(
            num_scalar_prefetch=2,
            grid=grid,
            in_specs=[
                # x tile at the k-block selected by the sparsity metadata.
                pl.BlockSpec((tb, tk),
                             lambda i, j, k, bi, bc: (i, bi[j * max_cnt + k])),
                # W tile in native (O, I) layout -> no per-call transpose pass.
                pl.BlockSpec((to, tk),
                             lambda i, j, k, bi, bc: (j, bi[j * max_cnt + k])),
                # bias tile (same for all k, i).
                pl.BlockSpec((1, to), lambda i, j, k, bi, bc: (0, j)),
            ],
            out_specs=pl.BlockSpec((tb, to), lambda i, j, k, bi, bc: (i, j)),
        ),
        compiler_params=pltpu.CompilerParams(
            dimension_semantics=("parallel", "parallel", "arbitrary"),
            vmem_limit_bytes=vmem_limit),
    )(blk_idx_flat, blk_cnt, xp, wp, bp)

    return out[:B, :O]


if __name__ == "__main__":
    # Small shapes consistent with SparseLinear(in_features, out_features).
    batch, in_features, out_features = 16, 512, 256
    tb, to, tk = 16, 128, 128   # small tiles so block skipping is exercised

    key = jax.random.PRNGKey(0)
    kx, kw, kb, km = jax.random.split(key, 4)

    x = jax.random.normal(kx, (batch, in_features), dtype=jnp.float32)

    # Block-structured "sparse" weight: ~60% of (to, tk) blocks entirely zero.
    # (The PyTorch module stores W as a sparse COO Parameter; the dense
    # materialization used here is numerically identical.)
    dense_w = jax.random.normal(kw, (out_features, in_features), dtype=jnp.float32)
    n_j, n_k = out_features // to, in_features // tk
    block_mask = jax.random.uniform(km, (n_j, n_k)) < 0.4
    elem_mask = jnp.repeat(jnp.repeat(block_mask, to, axis=0), tk, axis=1)
    weight = jnp.where(elem_mask, dense_w, 0.0)
    bias = jax.random.normal(kb, (out_features,), dtype=jnp.float32)

    # Sparsity analysis done once, at "load_weight" time, not per forward.
    blk_idx, blk_cnt = build_block_sparse_meta(weight, to, tk)

    y = sparse_linear(x, weight, bias, blk_idx, blk_cnt, tb=tb, to=to, tk=tk)
    y = jax.block_until_ready(y)

    # Reference (pure JAX) forward semantics: (W @ x.T + b[:, None]).T
    y_ref = (weight @ x.T + bias[:, None]).T
    assert y.shape == (batch, out_features)
    assert jnp.allclose(y, y_ref, atol=1e-4, rtol=1e-4), "mismatch vs reference"

    # TODO(synk): optionally cast x/W to bf16 (f32 accumulation) for ~2x less
    # HBM weight traffic if model precision allows.
    print("KERNEL_OK")
</pallas_src>

<mosaic_0001>
module attributes {stable_mosaic.version = 11 : i64} {
  func.func @_sparse_linear_kernel(%arg0: i32, %arg1: i32, %arg2: i32, %arg3: memref<4xi32, #tpu.memory_space<smem>>, %arg4: memref<2xi32, #tpu.memory_space<smem>>, %arg5: memref<16x128xf32, #tpu.memory_space<vmem>>, %arg6: memref<128x128xf32, #tpu.memory_space<vmem>>, %arg7: memref<1x128xf32, #tpu.memory_space<vmem>>, %arg8: memref<16x128xf32, #tpu.memory_space<vmem>>) attributes {dimension_semantics = [#tpu.dimension_semantics<parallel>, #tpu.dimension_semantics<parallel>, #tpu.dimension_semantics<arbitrary>], iteration_bounds = array<i64: 1, 2, 2>, scalar_prefetch = 2 : i64, scratch_operands = 0 : i64, tpu.core_type = #tpu.core_type<tc>, window_params = [{transform_indices = @transform_0, window_bounds = array<i64: 16, 128>}, {transform_indices = @transform_1, window_bounds = array<i64: 128, 128>}, {transform_indices = @transform_2, window_bounds = array<i64: 1, 128>}, {transform_indices = @transform_3, window_bounds = array<i64: 16, 128>}]} {
    %c0_i32 = arith.constant 0 : i32
    %0 = arith.cmpi eq, %arg2, %c0_i32 : i32
    %1 = arith.extui %0 : i1 to i32
    %c0_i32_0 = arith.constant 0 : i32
    %2 = arith.cmpi ne, %1, %c0_i32_0 : i32
    scf.if %2 {
      %c0 = arith.constant 0 : index
      %c0_2 = arith.constant 0 : index
      %8 = vector.load %arg7[%c0, %c0_2] : memref<1x128xf32, #tpu.memory_space<vmem>>, vector<1x128xf32>
      %9 = vector.shape_cast %8 : vector<1x128xf32> to vector<1x128xf32>
      %10 = vector.broadcast %9 : vector<1x128xf32> to vector<16x128xf32>
      %c0_3 = arith.constant 0 : index
      %c0_4 = arith.constant 0 : index
      %11 = vector.load %arg8[%c0_3, %c0_4] : memref<16x128xf32, #tpu.memory_space<vmem>>, vector<16x128xf32>
      tpu.vector_store %arg8[%c0_3, %c0_4], %10 {strides = array<i32>} : memref<16x128xf32, #tpu.memory_space<vmem>>, vector<16x128xf32>,
    } else {
    }
    %3 = arith.index_cast %arg1 : i32 to index
    %4 = memref.load %arg4[%3] : memref<2xi32, #tpu.memory_space<smem>>
    %5 = arith.cmpi slt, %arg2, %4 : i32
    %6 = arith.extui %5 : i1 to i32
    %c0_i32_1 = arith.constant 0 : i32
    %7 = arith.cmpi ne, %6, %c0_i32_1 : i32
    scf.if %7 {
      %c0 = arith.constant 0 : index
      %c0_2 = arith.constant 0 : index
      %8 = vector.load %arg8[%c0, %c0_2] : memref<16x128xf32, #tpu.memory_space<vmem>>, vector<16x128xf32>
      %c0_3 = arith.constant 0 : index
      %c0_4 = arith.constant 0 : index
      %9 = vector.load %arg5[%c0_3, %c0_4] : memref<16x128xf32, #tpu.memory_space<vmem>>, vector<16x128xf32>
      %c0_5 = arith.constant 0 : index
      %c0_6 = arith.constant 0 : index
      %10 = vector.load %arg6[%c0_5, %c0_6] : memref<128x128xf32, #tpu.memory_space<vmem>>, vector<128x128xf32>
      %cst = arith.constant dense<0.000000e+00> : vector<16x128xf32>
      %11 = tpu.matmul %9, %10, %cst {dimension_numbers = #tpu.dot_dimension_numbers<[1], [1], [0], [0], [0, 0, 1, 0], [], []>} : vector<16x128xf32>, vector<128x128xf32>, vector<16x128xf32> -> vector<16x128xf32>
      %12 = arith.addf %8, %11 : vector<16x128xf32>
      %c0_7 = arith.constant 0 : index
      %c0_8 = arith.constant 0 : index
      %13 = vector.load %arg8[%c0_7, %c0_8] : memref<16x128xf32, #tpu.memory_space<vmem>>, vector<16x128xf32>
      tpu.vector_store %arg8[%c0_7, %c0_8], %12 {strides = array<i32>} : memref<16x128xf32, #tpu.memory_space<vmem>>, vector<16x128xf32>,
    } else {
    }
    return
  }
  func.func @transform_0(%arg0: i32, %arg1: i32, %arg2: i32, %arg3: memref<4xi32, #tpu.memory_space<smem>>, %arg4: memref<2xi32, #tpu.memory_space<smem>>) -> (i32, i32) {
    %c2_i32 = arith.constant 2 : i32
    %0 = arith.muli %arg1, %c2_i32 : i32
    %1 = arith.addi %0, %arg2 : i32
    %2 = arith.index_cast %1 : i32 to index
    %3 = memref.load %arg3[%2] : memref<4xi32, #tpu.memory_space<smem>>
    %c0_i32 = arith.constant 0 : i32
    return %arg0, %3 : i32, i32
  }
  func.func @transform_1(%arg0: i32, %arg1: i32, %arg2: i32, %arg3: memref<4xi32, #tpu.memory_space<smem>>, %arg4: memref<2xi32, #tpu.memory_space<smem>>) -> (i32, i32) {
    %c2_i32 = arith.constant 2 : i32
    %0 = arith.muli %arg1, %c2_i32 : i32
    %1 = arith.addi %0, %arg2 : i32
    %2 = arith.index_cast %1 : i32 to index
    %3 = memref.load %arg3[%2] : memref<4xi32, #tpu.memory_space<smem>>
    %c0_i32 = arith.constant 0 : i32
    return %arg1, %3 : i32, i32
  }
  func.func @transform_2(%arg0: i32, %arg1: i32, %arg2: i32, %arg3: memref<4xi32, #tpu.memory_space<smem>>, %arg4: memref<2xi32, #tpu.memory_space<smem>>) -> (i32, i32) {
    %c0_i32 = arith.constant 0 : i32
    %c0_i32_0 = arith.constant 0 : i32
    return %c0_i32, %arg1 : i32, i32
  }
  func.func @transform_3(%arg0: i32, %arg1: i32, %arg2: i32, %arg3: memref<4xi32, #tpu.memory_space<smem>>, %arg4: memref<2xi32, #tpu.memory_space<smem>>) -> (i32, i32) {
    %c0_i32 = arith.constant 0 : i32
    return %arg0, %arg1 : i32, i32
  }
}

</mosaic_0001>

<llo_original>
// kernel: tpu_custom_call.1
$region0: #{tpu_custom_call.1}
  #allocation0 [shape = 'u32[]', space=smem, size = 0x4, offset = 0x4, fixed_abs, tag = 'smem constant byte address 0x4 - core index']
  #allocation1 [shape = 'u32[144,128]{1,0:T(1,128)}', space=vmem, size = 0x12000, scoped, tag = 'internal scratch']
  #allocation2 [shape = 's32[1]{0}', space=sflag, size = 0x4, scoped, tag = 'scoped memory for tpu_custom_call.1']
  #allocation3 [shape = 'u8[512]{0}', space=smem, size = 0x200, scoped, tag = 'prefetched SMEM operand 0']
  #allocation4 [shape = 'u8[512]{0}', space=smem, size = 0x200, scoped, tag = 'prefetched SMEM operand 1']
  %s0 = inlined_call_operand.hbm [shape: s32[4], index: 0, kind: input, shape index: {}]
  %s1 = inlined_call_operand.vmem [shape: s32[2], index: 1, kind: input, shape index: {}]
  %s2 = inlined_call_operand.hbm [shape: f32[16,512], index: 2, kind: input, shape index: {}]
  %s3 = inlined_call_operand.hbm [shape: f32[256,512], index: 3, kind: input, shape index: {}]
  %s4 = inlined_call_operand.vmem [shape: f32[1,256], index: 4, kind: input, shape index: {}]
  %s5 = inlined_call_operand.hbm [shape: f32[16,256], index: 5, kind: output, shape index: {}]
  %s6 = sld [smem:[#allocation0]]
  $region61: #{tpu_custom_call.1} parent=0
    _
  %s8 = ssub.s32 1, %s6
  %s9 = scalar_select 0, %s8, %s6
  %11 = dma.hbm_to_smem %s0, 16, [#allocation3], [#allocation2]
  %s12 = sshll.u32 %s1, 4
  %s13 = int_to_ptr.vmem [resolvable:$true] %s12
  %15 = dma.vmem_to_smem %s13, 16, [#allocation4], [#allocation2]
  %16 = dma.done [#allocation2], 32
  %17 = sfence
  $region1: #{tpu_custom_call.1} parent=0
    #allocation5 [shape = 'u8[16384]{0}', space=vmem, size = 0x4000, scoped, tag = 'input window, operand 2']
    #allocation6 [shape = 's32[2]{0}', space=sflag, size = 0x8, scoped, tag = 'scoped memory for tpu_custom_call.1']
    #allocation7 [shape = 's32[2]{0}', space=sflag, size = 0x8, scoped, tag = 'scoped memory for tpu_custom_call.1']
    #allocation8 [shape = 'u8[131072]{0}', space=vmem, size = 0x20000, scoped, tag = 'input window, operand 3']
    #allocation9 [shape = 's32[2]{0}', space=sflag, size = 0x8, scoped, tag = 'scoped memory for tpu_custom_call.1']
    #allocation10 [shape = 'u8[16384]{0}', space=vmem, size = 0x4000, scoped, tag = 'output window, operand 0']
    %18 = vsyncpa [#allocation6], 0
    %s19 = scalar_lea.sflag [#allocation6], 1
    %20 = vsyncpa %s19, 0
    %21 = vsyncpa [#allocation9], 0
    %s22 = scalar_lea.sflag [#allocation9], 1
    %23 = vsyncpa %s22, 0
    %24 = vsyncpa [#allocation7], 0
    %s25 = scalar_lea.sflag [#allocation7], 1
    %26 = vsyncpa %s25, 0
    loop: start=0, step=1, limit=6
    $region2: #{tpu_custom_call.1} parent=1 // loop_pre_header
      _
    $region3: #{tpu_custom_call.1} parent=1 // loop_header
      %s28 = sphi 0, %s32
      %p29 = scmp.ge.s32.totalorder %s28, 6
      %s35 = sphi 0, %s54
      %s36 = sphi 0, %s50
      %s37 = sphi 0, %s46
      %s38 = sphi 0, %s35
      %s39 = sphi 0, %s36
      %s40 = sphi 0, %s37
      %s41 = sphi 0, %s38
      %s42 = sphi 0, %s39
      %s43 = sphi 0, %s40
      %s65 = sphi 0, %s67
      %s68 = sphi 0, %s65
      %s69 = sphi 0, %s68
      %s85 = sphi 0, %s69
      %s99 = sphi 0, %s101
      %s102 = sphi 0, %s99
      %s103 = sphi 0, %s102
      %s119 = sphi 0, %s103
      %s125 = sphi 0, %s127
      %s128 = sphi 0, %s125
      %s129 = sphi 0, %s128
      %s145 = sphi 0, %s129
      %s153 = sphi 0, %s155
      %s156 = sphi 0, %s153
      %s157 = sphi 0, %s156
      %s173 = sphi 0, %s157
    $region4: #{tpu_custom_call.1} parent=1 // loop_header_branch
      %31 = sbr.rel (%p29) target = $region8
    $region5: #{tpu_custom_call.1} parent=1 // loop_body
      %s33 = ssub.s32 %s28, 1
      %s34 = ssub.s32 %s28, 2
      %s44 = sadd.s32 1, %s37
      %p45 = scmp.ge.s32.totalorder %s44, 2
      %s46 = scalar_select %p45, 0, %s44
      %s47 = sadd.s32 1, %s36
      %s48 = scalar_select %p45, %s47, %s36
      %p49 = scmp.ge.s32.totalorder %s48, 2
      %s50 = scalar_select %p49, 0, %s48
      %s51 = sadd.s32 1, %s35
      %s52 = scalar_select %p49, %s51, %s35
      %p53 = scmp.ge.s32.totalorder %s52, 1
      %s54 = scalar_select %p53, 0, %s52
      %s55 = smul.u32 %s36, 2
      %s56 = sadd.s32 %s55, %s37
      %s57 = sld [smem:[#allocation3 + %s56]]
      %s58 = smul.u32 %s50, 2
      %s59 = sadd.s32 %s58, %s46
      %s60 = sld [smem:[#allocation3 + %s59]]
      %s61 = ssub.s32 %s35, %s54
      %s62 = ssub.s32 %s57, %s60
      %s63 = sor.u32 %s61, %s62
      %p64 = scmp.eq.s32.totalorder %s63, 0
      %s66 = sadd.s32 %s65, 1
      %s67 = scalar_select %p64, %s65, %s66
      %p70 = pneg %p64
      %p71 = scmp.eq.s32.totalorder %s28, 3
      %p72 = por %p70, %p71
      %p73 = scmp.ne.s32.totalorder %s65, %s68
      %p74 = scmp.eq.s32.totalorder %s28, 0
      %p75 = por %p73, %p74
      %p76 = scmp.ne.s32.totalorder %s65, %s68
      %p77 = scmp.eq.s32.totalorder %s33, 3
      %p78 = por %p76, %p77
      %p79 = scmp.ne.s32.totalorder %s68, %s69
      %p80 = scmp.eq.s32.totalorder %s33, 0
      %p81 = por %p79, %p80
      %p82 = scmp.ne.s32.totalorder %s68, %s69
      %p83 = scmp.eq.s32.totalorder %s34, 3
      %p84 = por %p82, %p83
      %p86 = scmp.ne.s32.totalorder %s69, %s85
      %p87 = scmp.eq.s32.totalorder %s34, 0
      %p88 = por %p86, %p87
      %s89 = smul.u32 %s36, 2
      %s90 = sadd.s32 %s89, %s37
      %s91 = sld [smem:[#allocation3 + %s90]]
      %s92 = smul.u32 %s50, 2
      %s93 = sadd.s32 %s92, %s46
      %s94 = sld [smem:[#allocation3 + %s93]]
      %s95 = ssub.s32 %s36, %s50
      %s96 = ssub.s32 %s91, %s94
      %s97 = sor.u32 %s95, %s96
      %p98 = scmp.eq.s32.totalorder %s97, 0
      %s100 = sadd.s32 %s99, 1
      %s101 = scalar_select %p98, %s99, %s100
      %p104 = pneg %p98
      %p105 = scmp.eq.s32.totalorder %s28, 3
      %p106 = por %p104, %p105
      %p107 = scmp.ne.s32.totalorder %s99, %s102
      %p108 = scmp.eq.s32.totalorder %s28, 0
      %p109 = por %p107, %p108
      %p110 = scmp.ne.s32.totalorder %s99, %s102
      %p111 = scmp.eq.s32.totalorder %s33, 3
      %p112 = por %p110, %p111
      %p113 = scmp.ne.s32.totalorder %s102, %s103
      %p114 = scmp.eq.s32.totalorder %s33, 0
      %p115 = por %p113, %p114
      %p116 = scmp.ne.s32.totalorder %s102, %s103
      %p117 = scmp.eq.s32.totalorder %s34, 3
      %p118 = por %p116, %p117
      %p120 = scmp.ne.s32.totalorder %s103, %s119
      %p121 = scmp.eq.s32.totalorder %s34, 0
      %p122 = por %p120, %p121
      %s123 = ssub.s32 %s36, %s50
      %p124 = scmp.eq.s32.totalorder %s123, 0
      %s126 = sadd.s32 %s125, 1
      %s127 = scalar_select %p124, %s125, %s126
      %p130 = pneg %p124
      %p131 = scmp.eq.s32.totalorder %s28, 3
      %p132 = por %p130, %p131
      %p133 = scmp.ne.s32.totalorder %s125, %s128
      %p134 = scmp.eq.s32.totalorder %s28, 0
      %p135 = por %p133, %p134
      %p136 = scmp.ne.s32.totalorder %s125, %s128
      %p137 = scmp.eq.s32.totalorder %s33, 3
      %p138 = por %p136, %p137
      %p139 = scmp.ne.s32.totalorder %s128, %s129
      %p140 = scmp.eq.s32.totalorder %s33, 0
      %p141 = por %p139, %p140
      %p142 = scmp.ne.s32.totalorder %s128, %s129
      %p143 = scmp.eq.s32.totalorder %s34, 3
      %p144 = por %p142, %p143
      %p146 = scmp.ne.s32.totalorder %s129, %s145
      %p147 = scmp.eq.s32.totalorder %s34, 0
      %p148 = por %p146, %p147
      %s149 = ssub.s32 %s35, %s54
      %s150 = ssub.s32 %s36, %s50
      %s151 = sor.u32 %s149, %s150
      %p152 = scmp.eq.s32.totalorder %s151, 0
      %s154 = sadd.s32 %s153, 1
      %s155 = scalar_select %p152, %s153, %s154
      %p158 = pneg %p152
      %p159 = scmp.eq.s32.totalorder %s28, 3
      %p160 = por %p158, %p159
      %p161 = scmp.ne.s32.totalorder %s153, %s156
      %p162 = scmp.eq.s32.totalorder %s28, 0
      %p163 = por %p161, %p162
      %p164 = scmp.ne.s32.totalorder %s153, %s156
      %p165 = scmp.eq.s32.totalorder %s33, 3
      %p166 = por %p164, %p165
      %p167 = scmp.ne.s32.totalorder %s156, %s157
      %p168 = scmp.eq.s32.totalorder %s33, 0
      %p169 = por %p167, %p168
      %p170 = scmp.ne.s32.totalorder %s156, %s157
      %p171 = scmp.eq.s32.totalorder %s34, 3
      %p172 = por %p170, %p171
      %p174 = scmp.ne.s32.totalorder %s157, %s173
      %p175 = scmp.eq.s32.totalorder %s34, 0
      %p176 = por %p174, %p175
      %p177 = scmp.le.s32.totalorder 1, %s28
      %p178 = scmp.lt.s32.totalorder %s28, 5
      %p179 = pnand %p177, %p178
      %p180 = pneg %p179
      // Predicated region
      $region9: #{tpu_custom_call.1} parent=5 // pred_check
        _
      $region10: #{tpu_custom_call.1} parent=5 // pred_check_branch
        %182 = sbr.rel (%p179) target = $region12
      $region11: #{tpu_custom_call.1} parent=5 // pred_region
        %s183 = ssub.s32 %s28, 1
      $region12: #{tpu_custom_call.1} parent=5 // pred_fallthru
        _
      %p184 = scmp.lt.s32.totalorder %s28, 4
      // Predicated region
      $region13: #{tpu_custom_call.1} parent=5 // pred_check
        %p185 = pneg %p184
      $region14: #{tpu_custom_call.1} parent=5 // pred_check_branch
        %187 = sbr.rel (%p185) target = $region16
      $region15: #{tpu_custom_call.1} parent=5 // pred_region
        // Predicated region
        $region17: #{tpu_custom_call.1} parent=15 // pred_check
          %p188 = pneg %p75
        $region18: #{tpu_custom_call.1} parent=15 // pred_check_branch
          %190 = sbr.rel (%p188) target = $region20
        $region19: #{tpu_custom_call.1} parent=15 // pred_region
          %s191 = sand.u32 %s65, 1
          %s192 = scalar_lea.sflag [#allocation6], %s191
          %s193 = sand.u32 %s65, 1
          %s194 = smul.addr %s193, 16
          %s195 = scalar_lea.vmem [#allocation5], %s194
          %s196 = smul.u32 %s36, 2
          %s197 = sadd.s32 %s196, %s37
          %s198 = sld [smem:[#allocation3 + %s197]]
          %s199 = smul.u32 2, %s35
          %s201 = ssub.s32 256, 256
          %202 = vsyncadd %s192, %s201
          %s203 = smul.addr %s199, 4
          %s204 = sadd.s32 %s198, %s203
          %s205 = smul.addr %s204, 128
          %s206 = scalar_lea.hbm %s2, %s205
          %s207 = sshll.u32 %s195, 4
          %s208 = int_to_ptr.vmem [resolvable:$true] %s207
          %213 = dma.hbm_to_vmem [thread:$0]  %s206, 256, %s208, %s192, 512, 128, 8
        $region20: #{tpu_custom_call.1} parent=15 // pred_fallthru
          _
        // Predicated region
        $region21: #{tpu_custom_call.1} parent=15 // pred_check
          %p214 = pneg %p109
        $region22: #{tpu_custom_call.1} parent=15 // pred_check_branch
          %216 = sbr.rel (%p214) target = $region24
        $region23: #{tpu_custom_call.1} parent=15 // pred_region
          %s217 = sand.u32 %s99, 1
          %s218 = scalar_lea.sflag [#allocation9], %s217
          %s219 = sand.u32 %s99, 1
          %s220 = smul.addr %s219, 128
          %s221 = scalar_lea.vmem [#allocation8], %s220
          %s222 = smul.u32 %s36, 2
          %s223 = sadd.s32 %s222, %s37
          %s224 = sld [smem:[#allocation3 + %s223]]
          %s225 = smul.u32 16, %s36
          %s227 = ssub.s32 2048, 2048
          %228 = vsyncadd %s218, %s227
          %s229 = smul.addr %s225, 4
          %s230 = sadd.s32 %s224, %s229
          %s231 = smul.addr %s230, 128
          %s232 = scalar_lea.hbm %s3, %s231
          %s233 = sshll.u32 %s221, 4
          %s234 = int_to_ptr.vmem [resolvable:$true] %s233
          %239 = dma.hbm_to_vmem [thread:$0]  %s232, 2048, %s234, %s218, 512, 128, 8
        $region24: #{tpu_custom_call.1} parent=15 // pred_fallthru
          _
        // Predicated region
        $region25: #{tpu_custom_call.1} parent=15 // pred_check
          %p240 = pneg %p135
        $region26: #{tpu_custom_call.1} parent=15 // pred_check_branch
          %242 = sbr.rel (%p240) target = $region28
        $region27: #{tpu_custom_call.1} parent=15 // pred_region
          %p243 = scmp.lt.s32.totalorder %s36, 1
          %s244 = scalar_select %p243, %s36, 1
          %s245 = scalar_lea.vmem %s4, %s244
        $region28: #{tpu_custom_call.1} parent=15 // pred_fallthru
          _
      $region16: #{tpu_custom_call.1} parent=5 // pred_fallthru
        _
      %p246 = scmp.le.s32.totalorder 1, %s28
      %p247 = scmp.lt.s32.totalorder %s28, 5
      %p248 = pnand %p246, %p247
      %p249 = pneg %p248
      // Predicated region
      $region29: #{tpu_custom_call.1} parent=5 // pred_check
        _
      $region30: #{tpu_custom_call.1} parent=5 // pred_check_branch
        %251 = sbr.rel (%p248) target = $region32
      $region31: #{tpu_custom_call.1} parent=5 // pred_region
        %s252 = ssub.s32 %s28, 1
        %s253 = sand.u32 %s68, 1
        %s254 = scalar_lea.sflag [#allocation6], %s253
        %s255 = sand.u32 %s68, 1
        %s256 = smul.addr %s255, 16
        %s257 = scalar_lea.vmem [#allocation5], %s256
        // Predicated region
        $region33: #{tpu_custom_call.1} parent=31 // pred_check
          %p258 = pneg %p81
        $region34: #{tpu_custom_call.1} parent=31 // pred_check_branch
          %260 = sbr.rel (%p258) target = $region36
        $region35: #{tpu_custom_call.1} parent=31 // pred_region
          %261 = dma.done %s254, 256
        $region36: #{tpu_custom_call.1} parent=31 // pred_fallthru
          _
        %s262 = sand.u32 %s102, 1
        %s263 = scalar_lea.sflag [#allocation9], %s262
        %s264 = sand.u32 %s102, 1
        %s265 = smul.addr %s264, 128
        %s266 = scalar_lea.vmem [#allocation8], %s265
        // Predicated region
        $region37: #{tpu_custom_call.1} parent=31 // pred_check
          %p267 = pneg %p115
        $region38: #{tpu_custom_call.1} parent=31 // pred_check_branch
          %269 = sbr.rel (%p267) target = $region40
        $region39: #{tpu_custom_call.1} parent=31 // pred_region
          %270 = dma.done %s263, 2048
        $region40: #{tpu_custom_call.1} parent=31 // pred_fallthru
          _
        %s271 = sand.u32 %s68, 1
        %s272 = scalar_lea.sflag [#allocation6], %s271
        %s273 = sand.u32 %s68, 1
        %s274 = smul.addr %s273, 16
        %s275 = scalar_lea.vmem [#allocation5], %s274
        %p276 = pneg %p81
        %p277 = pneg %p78
        %s278 = sand.u32 %s102, 1
        %s279 = scalar_lea.sflag [#allocation9], %s278
        %s280 = sand.u32 %s102, 1
        %s281 = smul.addr %s280, 128
        %s282 = scalar_lea.vmem [#allocation8], %s281
        %p283 = pneg %p115
        %p284 = pneg %p112
        %p285 = scmp.lt.s32.totalorder %s39, 1
        %s286 = scalar_select %p285, %s39, 1
        %s287 = scalar_lea.vmem %s4, %s286
        %p288 = pneg %p141
        %p289 = pneg %p138
        %p290 = pneg %p169
        %p291 = pneg %p166
        %s292 = sand.u32 %s156, 1
        %s293 = scalar_lea.sflag [#allocation7], %s292
        %s294 = sand.u32 %s156, 1
        %s295 = smul.addr %s294, 16
        %s296 = scalar_lea.vmem [#allocation10], %s295
        %s297 = smul.u32 %s39, 2
        %s298 = sadd.s32 %s297, %s40
        %s299 = sld [smem:[#allocation3 + %s298]]
        %s300 = smul.u32 2, %s38
        %s301 = smul.u32 %s39, 2
        %s302 = sadd.s32 %s301, %s40
        %s303 = sld [smem:[#allocation3 + %s302]]
        %s304 = smul.u32 16, %s39
        %p305 = scmp.lt.s32.totalorder %s39, 1
        %s306 = scalar_select %p305, %s39, 1
        %s307 = scalar_lea.vmem %s4, %s306
        %s308 = smul.u32 2, %s38
        %p309 = scmp.eq.s32.totalorder %s40, 0
        // Predicated region
        $region41: #{tpu_custom_call.1} parent=31 // pred_check
          %p310 = pneg %p309
        $region42: #{tpu_custom_call.1} parent=31 // pred_check_branch
          %312 = sbr.rel (%p310) target = $region44
        $region43: #{tpu_custom_call.1} parent=31 // pred_region
          %v313 = vld [vmem:[%s307] sm:$0x1]
          %v315 = vlaneseq
          %v316 = vshrl.u32 %v315, 7
          %v317 = vsub.s32 0, %v316
          %v318 = vrot.slane %v313, %v317
          %320 = vst [vmem:[%s296] sm:$0xff] %v318
          %321 = vst [vmem:[%s296 + $0x8] sm:$0xff] %v318
        $region44: #{tpu_custom_call.1} parent=31 // pred_fallthru
          _
        %s322 = sld [smem:[#allocation4 + %s39]]
        %p323 = scmp.lt.s32.totalorder %s40, %s322
        // Predicated region
        $region45: #{tpu_custom_call.1} parent=31 // pred_check
          %p324 = pneg %p323
        $region46: #{tpu_custom_call.1} parent=31 // pred_check_branch
          %326 = sbr.rel (%p324) target = $region48
        $region47: #{tpu_custom_call.1} parent=31 // pred_region
          %v327 = vld [vmem:[%s296] sm:$0xff]
          %v328 = vld [vmem:[%s296 + $0x8] sm:$0xff]
          %v329 = vld [vmem:[%s257] sm:$0xff]
          %v330 = vld [vmem:[%s257 + $0x8] sm:$0xff]
          %v331 = vld [vmem:[%s266] sm:$0xff]
          %v332 = vld [vmem:[%s266 + $0x8] sm:$0xff]
          %v333 = vld [vmem:[%s266 + $0x10] sm:$0xff]
          %v334 = vld [vmem:[%s266 + $0x18] sm:$0xff]
          %v335 = vld [vmem:[%s266 + $0x20] sm:$0xff]
          %v336 = vld [vmem:[%s266 + $0x28] sm:$0xff]
          %v337 = vld [vmem:[%s266 + $0x30] sm:$0xff]
          %v338 = vld [vmem:[%s266 + $0x38] sm:$0xff]
          %v339 = vld [vmem:[%s266 + $0x40] sm:$0xff]
          %v340 = vld [vmem:[%s266 + $0x48] sm:$0xff]
          %v341 = vld [vmem:[%s266 + $0x50] sm:$0xff]
          %v342 = vld [vmem:[%s266 + $0x58] sm:$0xff]
          %v343 = vld [vmem:[%s266 + $0x60] sm:$0xff]
          %v344 = vld [vmem:[%s266 + $0x68] sm:$0xff]
          %v345 = vld [vmem:[%s266 + $0x70] sm:$0xff]
          %v346 = vld [vmem:[%s266 + $0x78] sm:$0xff]
          %347 = vmatprep.subr.mxu0 0.0
          %348 = vmatpush1.xpose.msra.mxu0 %v331
          %349 = vmatprep.subr.mxu0 0.0
          %350 = vmatpush1.xpose.msra.mxu0 %v332
          %351 = vmatprep.subr.mxu0 0.0
          %352 = vmatpush1.xpose.msra.mxu0 %v333
          %353 = vmatprep.subr.mxu0 0.0
          %354 = vmatpush1.xpose.msra.mxu0 %v334
          %355 = vmatprep.subr.mxu0 0.0
          %356 = vmatpush1.xpose.msra.mxu0 %v335
          %357 = vmatprep.subr.mxu0 0.0
          %358 = vmatpush1.xpose.msra.mxu0 %v336
          %359 = vmatprep.subr.mxu0 0.0
          %360 = vmatpush1.xpose.msra.mxu0 %v337
          %361 = vmatprep.subr.mxu0 0.0
          %362 = vmatpush1.xpose.msra.mxu0 %v338
          %363 = vmatprep.subr.mxu0 0.0
          %364 = vmatpush1.xpose.msra.mxu0 %v339
          %365 = vmatprep.subr.mxu0 0.0
          %366 = vmatpush1.xpose.msra.mxu0 %v340
          %367 = vmatprep.subr.mxu0 0.0
          %368 = vmatpush1.xpose.msra.mxu0 %v341
          %369 = vmatprep.subr.mxu0 0.0
          %370 = vmatpush1.xpose.msra.mxu0 %v342
          %371 = vmatprep.subr.mxu0 0.0
          %372 = vmatpush1.xpose.msra.mxu0 %v343
          %373 = vmatprep.subr.mxu0 0.0
          %374 = vmatpush1.xpose.msra.mxu0 %v344
          %375 = vmatprep.subr.mxu0 0.0
          %376 = vmatpush1.xpose.msra.mxu0 %v345
          %377 = vmatprep.subr.mxu0 0.0
          %378 = vmatpush1.xpose.msra.mxu0 %v346
          %379 = vmatprep.subr.mxu0 0.0
          %380 = vmatpush1.xpose.msra.mxu0 0.0
          %381 = vmatprep.subr.mxu0 0.0
          %382 = vmatpush1.xpose.msra.mxu0 0.0
          %383 = vmatprep.subr.mxu0 0.0
          %384 = vmatpush1.xpose.msra.mxu0 0.0
          %385 = vmatprep.subr.mxu0 0.0
          %386 = vmatpush1.xpose.msra.mxu0 0.0
          %387 = vmatprep.subr.mxu0 0.0
          %388 = vmatpush1.xpose.msra.mxu0 0.0
          %389 = vmatprep.subr.mxu0 0.0
          %390 = vmatpush1.xpose.msra.mxu0 0.0
          %391 = vmatprep.subr.mxu0 0.0
          %392 = vmatpush1.xpose.msra.mxu0 0.0
          %393 = vmatprep.subr.mxu0 0.0
          %394 = vmatpush1.xpose.msra.mxu0 0.0
          %395 = vmatprep.subr.mxu0 0.0
          %396 = vmatpush1.xpose.msra.mxu0 0.0
          %397 = vmatprep.subr.mxu0 0.0
          %398 = vmatpush1.xpose.msra.mxu0 0.0
          %399 = vmatprep.subr.mxu0 0.0
          %400 = vmatpush1.xpose.msra.mxu0 0.0
          %401 = vmatprep.subr.mxu0 0.0
          %402 = vmatpush1.xpose.msra.mxu0 0.0
          %403 = vmatprep.subr.mxu0 0.0
          %404 = vmatpush1.xpose.msra.mxu0 0.0
          %405 = vmatprep.subr.mxu0 0.0
          %406 = vmatpush1.xpose.msra.mxu0 0.0
          %407 = vmatprep.subr.mxu0 0.0
          %408 = vmatpush1.xpose.msra.mxu0 0.0
          %409 = vmatprep.subr.mxu0 0.0
          %410 = vmatpush1.xpose.msra.mxu0 0.0
          %411 = vmatprep.mubr.f32.mxu0 0.0
          %412 = vmatmul.mubr.f32.gmra.mrb[0].mxu0 %v329
          %v413 = vpop.f32.mrb[0].mxu0
          %v414 = vadd.f32 0.0, %v413
          %v415 = vpop.f32.mrb[0].mxu0
          %416 = vmatprep.mubr.f32.mxu0 0.0
          %417 = vmatmul.mubr.f32.gmra.mrb[0].mxu0 %v330
          %v418 = vpop.f32.mrb[0].mxu0
          %v419 = vadd.f32 0.0, %v418
          %v420 = vpop.f32.mrb[0].mxu0
          %421 = vdwg.mxu0
          %v422 = vadd.f32 %v327, %v414
          %v423 = vadd.f32 %v328, %v419
          %424 = vst [vmem:[%s296] sm:$0xff] %v422
          %425 = vst [vmem:[%s296 + $0x8] sm:$0xff] %v423
        $region48: #{tpu_custom_call.1} parent=31 // pred_fallthru
          _
        %s426 = sand.u32 %s156, 1
        %s427 = scalar_lea.sflag [#allocation7], %s426
        %s428 = sand.u32 %s156, 1
        %s429 = smul.addr %s428, 16
        %s430 = scalar_lea.vmem [#allocation10], %s429
        // Predicated region
        $region49: #{tpu_custom_call.1} parent=31 // pred_check
          %p431 = pneg %p166
        $region50: #{tpu_custom_call.1} parent=31 // pred_check_branch
          %433 = sbr.rel (%p431) target = $region52
        $region51: #{tpu_custom_call.1} parent=31 // pred_region
          %s434 = smul.u32 2, %s38
          %s436 = ssub.s32 256, 256
          %437 = vsyncadd %s427, %s436
          %s438 = smul.addr %s434, 2
          %s439 = sadd.s32 %s39, %s438
          %s440 = smul.addr %s439, 128
          %s441 = scalar_lea.hbm %s5, %s440
          %s442 = sshll.u32 %s430, 4
          %s443 = int_to_ptr.vmem [resolvable:$true] %s442
          %448 = dma.vmem_to_hbm [thread:$0]  %s443, 256, %s441, %s427, 128, 256, 8
        $region52: #{tpu_custom_call.1} parent=31 // pred_fallthru
          _
      $region32: #{tpu_custom_call.1} parent=5 // pred_fallthru
        _
      %p449 = scmp.le.s32.totalorder 2, %s28
      // Predicated region
      $region53: #{tpu_custom_call.1} parent=5 // pred_check
        %p450 = pneg %p449
      $region54: #{tpu_custom_call.1} parent=5 // pred_check_branch
        %452 = sbr.rel (%p450) target = $region56
      $region55: #{tpu_custom_call.1} parent=5 // pred_region
        %s453 = ssub.s32 %s28, 2
        // Predicated region
        $region57: #{tpu_custom_call.1} parent=55 // pred_check
          %p454 = pneg %p172
        $region58: #{tpu_custom_call.1} parent=55 // pred_check_branch
          %456 = sbr.rel (%p454) target = $region60
        $region59: #{tpu_custom_call.1} parent=55 // pred_region
          %s457 = sand.u32 %s157, 1
          %s458 = scalar_lea.sflag [#allocation7], %s457
          %s459 = sand.u32 %s157, 1
          %s460 = smul.addr %s459, 16
          %s461 = scalar_lea.vmem [#allocation10], %s460
          %462 = dma.done %s458, 256
        $region60: #{tpu_custom_call.1} parent=55 // pred_fallthru
          _
      $region56: #{tpu_custom_call.1} parent=5 // pred_fallthru
        _
    $region6: #{tpu_custom_call.1} parent=1 // loop_footer
      %s32 = sadd.s32 1, %s28
    $region7: #{tpu_custom_call.1} parent=1 // loop_footer_branch
      %27 = sbr.rel target = $region3
    $region8: #{tpu_custom_call.1} parent=1 // loop_exit
      _
    %463 = vsyncpa [#allocation6], 1
    %s464 = scalar_lea.sflag [#allocation6], 1
    %465 = vsyncpa %s464, 1
    %466 = vsyncpa [#allocation9], 1
    %s467 = scalar_lea.sflag [#allocation9], 1
    %468 = vsyncpa %s467, 1
    %469 = vsyncpa [#allocation7], 1
    %s470 = scalar_lea.sflag [#allocation7], 1
    %471 = vsyncpa %s470, 1

</llo_original>
